<compile_context>
chip_gen: v7x
topology: tpu7x:2x2x1
jax: 0.10.0
libtpu: 0.0.40
codegen_flags: <defaults>
</compile_context>

<pallas_src>
import functools

import jax
import jax.numpy as jnp
from jax.experimental import pallas as pl
from jax.experimental.pallas import tpu as pltpu


def fm_kernel(uid_ref, tid_ref, utab_ref, ttab_ref, out_ref):
    """uid_ref: (TB, 1) i32; tid_ref: (T*TB, 1) i32 (tag-major within the tile);
    utab_ref: (NU, D) f32; ttab_ref: (NT, D) f32; out_ref: (TB, 1) f32."""
    tb = uid_ref.shape[0]
    t_tb = tid_ref.shape[0]
    t = t_tb // tb
    nu = utab_ref.shape[0]
    nt = ttab_ref.shape[0]

    # One-hot gathers on the MXU.  Each iota is built exactly once (hoisted out
    # of any per-tag loop) — JAX does not CSE broadcast/iota.
    iota_u = jax.lax.broadcasted_iota(jnp.int32, (tb, nu), 1)
    iota_t = jax.lax.broadcasted_iota(jnp.int32, (t_tb, nt), 1)

    def gather_renorm(ids_col, iota, table):
        # ids_col: (R, 1) int32; iota: (R, N); table: (N, D) f32.
        oh = (ids_col == iota).astype(jnp.float32)                    # (R, N)
        e = jnp.dot(oh, table, preferred_element_type=jnp.float32)    # (R, D)
        # max_norm=2 renorm without sqrt/divide: rescale iff sumsq > 4,
        # scale = 2 * rsqrt(sumsq)  (rsqrt -> EUP slot, effectively free).
        ss = jnp.sum(e * e, axis=-1, keepdims=True)                   # (R, 1)
        scale = jnp.where(ss > 4.0, 2.0 * jax.lax.rsqrt(ss), 1.0)
        # Return renormed rows and their post-renorm sum of squares (reuse ss —
        # avoids a second full-D reduction for the FM sum-of-squares term).
        return scale * e, (scale * scale) * ss

    # User feature: one (TB, NU) @ (NU, D) matmul.
    x_u, q_u = gather_renorm(uid_ref[...], iota_u, utab_ref[...])

    # All T tag features fused into ONE (T*TB, NT) @ (NT, D) matmul: the tag
    # table is pushed into the MXU once instead of T times, and only one iota /
    # one lane-broadcast of the id column is needed.
    x_t, q_t = gather_renorm(tid_ref[...], iota_t, ttab_ref[...])

    # Accumulate the T contiguous (TB, D) slices (static, 8-aligned slices).
    s_acc = x_u          # (TB, D): running sum over features
    q_acc = q_u          # (TB, 1): running sum of per-row sum-of-squares
    for j in range(t):
        s_acc = s_acc + x_t[j * tb:(j + 1) * tb, :]
        q_acc = q_acc + q_t[j * tb:(j + 1) * tb, :]

    # FMcross: 0.5 * sum_d [ (sum_f x)^2 - sum_f x^2 ], then sigmoid.
    out = 0.5 * (jnp.sum(s_acc * s_acc, axis=-1, keepdims=True) - q_acc)
    # Output traffic is only B*4 bytes; a lane-dense (B/128, 128) out layout is
    # possible but second-order here since compute dominates (measure first).
    out_ref[...] = jax.nn.sigmoid(out)


def _round_up(x, m):
    return ((x + m - 1) // m) * m


@functools.partial(jax.jit, static_argnames=("tile_b",))
def fm_forward(user_table, tag_table, user_id, tag_ids, *, tile_b=None):
    """user_id: (B,) int, tag_ids: (B, T) int -> (B,) f32 click probability."""
    user_table = user_table.astype(jnp.float32)
    tag_table = tag_table.astype(jnp.float32)
    B = user_id.shape[0]
    T = tag_ids.shape[1]
    NU, D = user_table.shape
    NT, _ = tag_table.shape

    if tile_b is None:
        # Aim for >= 2 grid steps so v7x's two TensorCores both get work
        # (dimension_semantics=("parallel",)); keep blocks a multiple of 8
        # sublanes and the per-step working set a few MiB, which is safe under
        # v5e's 16 MiB scoped-VMEM default as well as v7x's 64 MiB physical
        # VMEM.  (On v6e with small tables a larger tile_b, 1024-2048, can be
        # passed explicitly to amortize the ~0.35 us per-step overhead.)
        tile_b = max(8, min(512, _round_up(pl.cdiv(B, 2), 8)))
    n_tiles = pl.cdiv(B, tile_b)
    b_pad = n_tiles * tile_b

    uid = user_id.astype(jnp.int32).reshape(B, 1)
    tid = tag_ids.astype(jnp.int32)
    if b_pad != B:
        # Tail tile: pad with index 0 (valid rows), slice the result back.
        uid = jnp.pad(uid, ((0, b_pad - B), (0, 0)))
        tid = jnp.pad(tid, ((0, b_pad - B), (0, 0)))

    # Lay tag ids out tag-major *within each batch tile* so every grid step
    # reads one contiguous (T*tile_b, 1) column -> a single fused one-hot
    # matmul in the kernel.  Row (j*tile_b + r) of tile i is tag j of batch row
    # (i*tile_b + r).
    tid_col = (tid.reshape(n_tiles, tile_b, T)
               .transpose(0, 2, 1)
               .reshape(n_tiles * T * tile_b, 1))

    # Explicit scoped-VMEM limit: rough per-step working-set estimate with 2x
    # headroom, floored at 32 MiB (v5e's default is only 16 MiB) and capped at
    # 48 MiB (safe on v7x's 64 MiB physical VMEM).
    est = (
        (NU + NT) * D * 4                        # tables, single resident copy
        + 2 * (tile_b + T * tile_b) * 128 * 4    # id blocks (double-buffered, lane-padded)
        + 2 * tile_b * 128 * 4                   # out block (double-buffered, lane-padded)
        + (tile_b * NU + T * tile_b * NT) * 4    # one-hot intermediates
        + 2 * (T + 1) * tile_b * D * 4           # gathered + renormed rows
        + 4 * tile_b * max(D, 128) * 4           # accumulators / slack
    )
    vmem_limit = int(min(max(2 * est, 32 * 1024 * 1024), 48 * 1024 * 1024))

    # TODO(synk): for production-size tables that do not fit VMEM (or where the
    # O(B * table_rows) one-hot gather dominates), switch to a true row gather:
    # PrefetchScalarGridSpec ids in SMEM + double-buffered per-row
    # pltpu.make_async_copy from tables kept in memory_space=pl.ANY.
    out = pl.pallas_call(
        fm_kernel,
        out_shape=jax.ShapeDtypeStruct((b_pad, 1), jnp.float32),
        grid=(n_tiles,),
        in_specs=[
            pl.BlockSpec((tile_b, 1), lambda i: (i, 0)),       # user ids (pipelined)
            pl.BlockSpec((T * tile_b, 1), lambda i: (i, 0)),   # tag ids, tag-major per tile
            # Whole-array VMEM operands: copied in once, NOT double-buffered
            # across grid steps (halves resident-table footprint vs. default).
            pl.BlockSpec(memory_space=pltpu.MemorySpace.VMEM),  # user table
            pl.BlockSpec(memory_space=pltpu.MemorySpace.VMEM),  # tag table
        ],
        out_specs=pl.BlockSpec((tile_b, 1), lambda i: (i, 0)),
        compiler_params=pltpu.CompilerParams(
            dimension_semantics=("parallel",),                 # megacore shard on v7x
            vmem_limit_bytes=vmem_limit,
        ),
    )(uid, tid_col, user_table, tag_table)
    return out[:B, 0]   # torch.squeeze -> (B,)


def reference_forward(user_table, tag_table, user_id, tag_ids):
    """Pure-JAX reference mirroring the PyTorch module (incl. its eps formula)."""
    def renorm(e):
        n = jnp.linalg.norm(e, axis=-1, keepdims=True)
        return e * jnp.where(n > 2.0, 2.0 / (n + 1e-7), 1.0)

    user_emb = renorm(jnp.take(user_table, user_id, axis=0))[:, None, :]
    tags_emb = renorm(jnp.take(tag_table, tag_ids, axis=0))
    feats = jnp.concatenate([user_emb, tags_emb], axis=1)
    square_of_sum = jnp.sum(feats, axis=1) ** 2
    sum_of_square = jnp.sum(feats ** 2, axis=1)
    out = 0.5 * jnp.sum(square_of_sum - sum_of_square, axis=1)
    return jax.nn.sigmoid(out)


if __name__ == "__main__":
    # Small, deterministic setup.
    n_users, n_item_tags, dim = 32, 16, 32
    batch, n_tags_per_item = 8, 4

    key = jax.random.PRNGKey(0)
    k_u, k_t, k_uid, k_tid = jax.random.split(key, 4)

    # nn.Embedding default init: N(0, 1).
    user_table = jax.random.normal(k_u, (n_users, dim), dtype=jnp.float32)
    tag_table = jax.random.normal(k_t, (n_item_tags, dim), dtype=jnp.float32)

    user_id = jax.random.randint(k_uid, (batch,), 0, n_users, dtype=jnp.int32)
    tag_ids = jax.random.randint(k_tid, (batch, n_tags_per_item), 0, n_item_tags,
                                 dtype=jnp.int32)

    click_prob = fm_forward(user_table, tag_table, user_id, tag_ids)
    jax.block_until_ready(click_prob)

    ref = reference_forward(user_table, tag_table, user_id, tag_ids)
    assert click_prob.shape == (batch,)
    assert jnp.allclose(click_prob, ref, atol=1e-5, rtol=1e-5), (click_prob, ref)

    print("KERNEL_OK")
</pallas_src>

<mosaic_0001>
module attributes {stable_mosaic.version = 11 : i64} {
  func.func @fm_kernel(%arg0: i32, %arg1: memref<8x1xi32, #tpu.memory_space<vmem>>, %arg2: memref<32x1xi32, #tpu.memory_space<vmem>>, %arg3: memref<32x32xf32, #tpu.memory_space<vmem>>, %arg4: memref<16x32xf32, #tpu.memory_space<vmem>>, %arg5: memref<8x1xf32, #tpu.memory_space<vmem>>) attributes {dimension_semantics = [#tpu.dimension_semantics<parallel>], iteration_bounds = array<i64: 1>, scalar_prefetch = 0 : i64, scratch_operands = 0 : i64, tpu.core_type = #tpu.core_type<tc>, window_params = [{transform_indices = @transform_0, window_bounds = array<i64: 8, 1>}, {transform_indices = @transform_1, window_bounds = array<i64: 32, 1>}, {pipeline_mode = #tpu.pipeline_mode<synchronous>, transform_indices = @transform_2, window_bounds = array<i64: 32, 32>}, {pipeline_mode = #tpu.pipeline_mode<synchronous>, transform_indices = @transform_3, window_bounds = array<i64: 16, 32>}, {transform_indices = @transform_4, window_bounds = array<i64: 8, 1>}]} {
    %0 = tpu.iota {dimensions = array<i32: 1>} : vector<8x32xi32>
    %1 = tpu.iota {dimensions = array<i32: 1>} : vector<32x16xi32>
    %c0 = arith.constant 0 : index
    %c0_0 = arith.constant 0 : index
    %2 = vector.load %arg1[%c0, %c0_0] : memref<8x1xi32, #tpu.memory_space<vmem>>, vector<8x1xi32>
    %c0_1 = arith.constant 0 : index
    %c0_2 = arith.constant 0 : index
    %3 = vector.load %arg3[%c0_1, %c0_2] : memref<32x32xf32, #tpu.memory_space<vmem>>, vector<32x32xf32>
    %4 = vector.broadcast %2 : vector<8x1xi32> to vector<8x32xi32>
    %5 = arith.cmpi eq, %4, %0 : vector<8x32xi32>
    %6 = arith.extui %5 : vector<8x32xi1> to vector<8x32xi32>
    %7 = arith.sitofp %6 : vector<8x32xi32> to vector<8x32xf32>
    %cst = arith.constant dense<0.000000e+00> : vector<8x32xf32>
    %8 = tpu.matmul %7, %3, %cst {dimension_numbers = #tpu.dot_dimension_numbers<[1], [0], [0], [1], [0, 0, 1, 1], [], []>} : vector<8x32xf32>, vector<32x32xf32>, vector<8x32xf32> -> vector<8x32xf32>
    %9 = arith.mulf %8, %8 : vector<8x32xf32>
    %cst_3 = arith.constant dense<0.000000e+00> : vector<8xf32>
    %10 = vector.multi_reduction <add>, %9, %cst_3 [1] : vector<8x32xf32> to vector<8xf32>
    %11 = vector.shape_cast %10 : vector<8xf32> to vector<8x1xf32>
    %cst_4 = arith.constant 4.000000e+00 : f32
    %12 = vector.broadcast %cst_4 : f32 to vector<8x1xf32>
    %13 = arith.cmpf ogt, %11, %12 : vector<8x1xf32>
    %14 = math.rsqrt %11 : vector<8x1xf32>
    %cst_5 = arith.constant 2.000000e+00 : f32
    %15 = vector.broadcast %cst_5 : f32 to vector<8x1xf32>
    %16 = arith.mulf %15, %14 : vector<8x1xf32>
    %cst_6 = arith.constant 1.000000e+00 : f32
    %17 = vector.broadcast %cst_6 : f32 to vector<8x1xf32>
    %18 = arith.select %13, %16, %17 : vector<8x1xi1>, vector<8x1xf32>
    %19 = vector.broadcast %18 : vector<8x1xf32> to vector<8x32xf32>
    %20 = arith.mulf %19, %8 : vector<8x32xf32>
    %21 = arith.mulf %18, %18 : vector<8x1xf32>
    %22 = arith.mulf %21, %11 : vector<8x1xf32>
    %c0_7 = arith.constant 0 : index
    %c0_8 = arith.constant 0 : index
    %23 = vector.load %arg2[%c0_7, %c0_8] : memref<32x1xi32, #tpu.memory_space<vmem>>, vector<32x1xi32>
    %c0_9 = arith.constant 0 : index
    %c0_10 = arith.constant 0 : index
    %24 = vector.load %arg4[%c0_9, %c0_10] : memref<16x32xf32, #tpu.memory_space<vmem>>, vector<16x32xf32>
    %25 = vector.broadcast %23 : vector<32x1xi32> to vector<32x16xi32>
    %26 = arith.cmpi eq, %25, %1 : vector<32x16xi32>
    %27 = arith.extui %26 : vector<32x16xi1> to vector<32x16xi32>
    %28 = arith.sitofp %27 : vector<32x16xi32> to vector<32x16xf32>
    %cst_11 = arith.constant dense<0.000000e+00> : vector<32x32xf32>
    %29 = tpu.matmul %28, %24, %cst_11 {dimension_numbers = #tpu.dot_dimension_numbers<[1], [0], [0], [1], [0, 0, 1, 1], [], []>} : vector<32x16xf32>, vector<16x32xf32>, vector<32x32xf32> -> vector<32x32xf32>
    %30 = arith.mulf %29, %29 : vector<32x32xf32>
    %cst_12 = arith.constant dense<0.000000e+00> : vector<32xf32>
    %31 = vector.multi_reduction <add>, %30, %cst_12 [1] : vector<32x32xf32> to vector<32xf32>
    %32 = vector.shape_cast %31 : vector<32xf32> to vector<32x1xf32>
    %cst_13 = arith.constant 4.000000e+00 : f32
    %33 = vector.broadcast %cst_13 : f32 to vector<32x1xf32>
    %34 = arith.cmpf ogt, %32, %33 : vector<32x1xf32>
    %35 = math.rsqrt %32 : vector<32x1xf32>
    %cst_14 = arith.constant 2.000000e+00 : f32
    %36 = vector.broadcast %cst_14 : f32 to vector<32x1xf32>
    %37 = arith.mulf %36, %35 : vector<32x1xf32>
    %cst_15 = arith.constant 1.000000e+00 : f32
    %38 = vector.broadcast %cst_15 : f32 to vector<32x1xf32>
    %39 = arith.select %34, %37, %38 : vector<32x1xi1>, vector<32x1xf32>
    %40 = vector.broadcast %39 : vector<32x1xf32> to vector<32x32xf32>
    %41 = arith.mulf %40, %29 : vector<32x32xf32>
    %42 = arith.mulf %39, %39 : vector<32x1xf32>
    %43 = arith.mulf %42, %32 : vector<32x1xf32>
    %44 = vector.extract_strided_slice %41 {offsets = [0, 0], sizes = [8, 32], strides = [1, 1]} : vector<32x32xf32> to vector<8x32xf32>
    %45 = arith.addf %20, %44 : vector<8x32xf32>
    %46 = vector.extract_strided_slice %43 {offsets = [0, 0], sizes = [8, 1], strides = [1, 1]} : vector<32x1xf32> to vector<8x1xf32>
    %47 = arith.addf %22, %46 : vector<8x1xf32>
    %48 = vector.extract_strided_slice %41 {offsets = [8, 0], sizes = [8, 32], strides = [1, 1]} : vector<32x32xf32> to vector<8x32xf32>
    %49 = arith.addf %45, %48 : vector<8x32xf32>
    %50 = vector.extract_strided_slice %43 {offsets = [8, 0], sizes = [8, 1], strides = [1, 1]} : vector<32x1xf32> to vector<8x1xf32>
    %51 = arith.addf %47, %50 : vector<8x1xf32>
    %52 = vector.extract_strided_slice %41 {offsets = [16, 0], sizes = [8, 32], strides = [1, 1]} : vector<32x32xf32> to vector<8x32xf32>
    %53 = arith.addf %49, %52 : vector<8x32xf32>
    %54 = vector.extract_strided_slice %43 {offsets = [16, 0], sizes = [8, 1], strides = [1, 1]} : vector<32x1xf32> to vector<8x1xf32>
    %55 = arith.addf %51, %54 : vector<8x1xf32>
    %56 = vector.extract_strided_slice %41 {offsets = [24, 0], sizes = [8, 32], strides = [1, 1]} : vector<32x32xf32> to vector<8x32xf32>
    %57 = arith.addf %53, %56 : vector<8x32xf32>
    %58 = vector.extract_strided_slice %43 {offsets = [24, 0], sizes = [8, 1], strides = [1, 1]} : vector<32x1xf32> to vector<8x1xf32>
    %59 = arith.addf %55, %58 : vector<8x1xf32>
    %60 = arith.mulf %57, %57 : vector<8x32xf32>
    %cst_16 = arith.constant dense<0.000000e+00> : vector<8xf32>
    %61 = vector.multi_reduction <add>, %60, %cst_16 [1] : vector<8x32xf32> to vector<8xf32>
    %62 = vector.shape_cast %61 : vector<8xf32> to vector<8x1xf32>
    %63 = arith.subf %62, %59 : vector<8x1xf32>
    %cst_17 = arith.constant 5.000000e-01 : f32
    %64 = vector.broadcast %cst_17 : f32 to vector<8x1xf32>
    %65 = arith.mulf %64, %63 : vector<8x1xf32>
    %66 = arith.negf %65 : vector<8x1xf32>
    %67 = math.exp %66 : vector<8x1xf32>
    %cst_18 = arith.constant 1.000000e+00 : f32
    %68 = vector.broadcast %cst_18 : f32 to vector<8x1xf32>
    %69 = arith.addf %68, %67 : vector<8x1xf32>
    %70 = arith.divf %68, %69 : vector<8x1xf32>
    %c0_19 = arith.constant 0 : index
    %c0_20 = arith.constant 0 : index
    %71 = vector.load %arg5[%c0_19, %c0_20] : memref<8x1xf32, #tpu.memory_space<vmem>>, vector<8x1xf32>
    tpu.vector_store %arg5[%c0_19, %c0_20], %70 {strides = array<i32>} : memref<8x1xf32, #tpu.memory_space<vmem>>, vector<8x1xf32>,
    return
  }
  func.func @transform_0(%arg0: i32) -> (i32, i32) {
    %c0_i32 = arith.constant 0 : i32
    %c0_i32_0 = arith.constant 0 : i32
    return %arg0, %c0_i32 : i32, i32
  }
  func.func @transform_1(%arg0: i32) -> (i32, i32) {
    %c0_i32 = arith.constant 0 : i32
    %c0_i32_0 = arith.constant 0 : i32
    return %arg0, %c0_i32 : i32, i32
  }
  func.func @transform_2(%arg0: i32) -> (i32, i32) {
    %c0_i32 = arith.constant 0 : i32
    %c0_i32_0 = arith.constant 0 : i32
    %c0_i32_1 = arith.constant 0 : i32
    return %c0_i32, %c0_i32_0 : i32, i32
  }
  func.func @transform_3(%arg0: i32) -> (i32, i32) {
    %c0_i32 = arith.constant 0 : i32
    %c0_i32_0 = arith.constant 0 : i32
    %c0_i32_1 = arith.constant 0 : i32
    return %c0_i32, %c0_i32_0 : i32, i32
  }
  func.func @transform_4(%arg0: i32) -> (i32, i32) {
    %c0_i32 = arith.constant 0 : i32
    %c0_i32_0 = arith.constant 0 : i32
    return %arg0, %c0_i32 : i32, i32
  }
}

</mosaic_0001>

<llo_original>
// kernel: fm_forward.1
$region0: #{fm_forward.1}
  #allocation0 [shape = 'u32[]', space=smem, size = 0x4, offset = 0x4, fixed_abs, tag = 'smem constant byte address 0x4 - core index']
  #allocation1 [shape = 'u32[144,128]{1,0:T(1,128)}', space=vmem, size = 0x12000, scoped, tag = 'internal scratch']
  %s0 = inlined_call_operand.vmem [shape: s32[8,1], index: 0, kind: input, shape index: {}]
  %s1 = inlined_call_operand.vmem [shape: s32[32,1], index: 1, kind: input, shape index: {}]
  %s2 = inlined_call_operand.vmem [shape: f32[32,32], index: 2, kind: input, shape index: {}]
  %s3 = inlined_call_operand.vmem [shape: f32[16,32], index: 3, kind: input, shape index: {}]
  %s4 = inlined_call_operand.vmem [shape: f32[8,1], index: 4, kind: output, shape index: {}]
  %s5 = sld [smem:[#allocation0]]
  $region26: #{fm_forward.1} parent=0
    _
  %s7 = ssub.s32 1, %s5
  %s8 = scalar_select 0, %s7, %s5
  // Predicated region
  $region2: #{fm_forward.1} parent=0 // pred_check
    _
  $region3: #{fm_forward.1} parent=0 // pred_check_branch
    %10 = sbr.rel (0) target = $region5
  $region4: #{fm_forward.1} parent=0 // pred_region
    _
  $region5: #{fm_forward.1} parent=0 // pred_fallthru
    _
  // Predicated region
  $region6: #{fm_forward.1} parent=0 // pred_check
    _
  $region7: #{fm_forward.1} parent=0 // pred_check_branch
    %12 = sbr.rel (0) target = $region9
  $region8: #{fm_forward.1} parent=0 // pred_region
    _
  $region9: #{fm_forward.1} parent=0 // pred_fallthru
    _
  // Predicated region
  $region10: #{fm_forward.1} parent=0 // pred_check
    _
  $region11: #{fm_forward.1} parent=0 // pred_check_branch
    %14 = sbr.rel (0) target = $region13
  $region12: #{fm_forward.1} parent=0 // pred_region
    _
  $region13: #{fm_forward.1} parent=0 // pred_fallthru
    _
  // Predicated region
  $region14: #{fm_forward.1} parent=0 // pred_check
    _
  $region15: #{fm_forward.1} parent=0 // pred_check_branch
    %16 = sbr.rel (0) target = $region17
  $region16: #{fm_forward.1} parent=0 // pred_region
    _
  $region17: #{fm_forward.1} parent=0 // pred_fallthru
    _
  %v17 = vlaneseq
  %v18 = vand.u32 %v17, 127
  %v19 = vld [vmem:[%s0] sm:$0xff]
  %v20 = vld [vmem:[%s2] sm:$0xff]
  %v21 = vld [vmem:[%s2 + $0x8] sm:$0xff]
  %v22 = vld [vmem:[%s2 + $0x10] sm:$0xff]
  %v23 = vld [vmem:[%s2 + $0x18] sm:$0xff]
  %24 = vset.pattern.permute.xlu0 0
  %25 = vperm.xlu0 %24, %v19
  %v26 = vpop.permute.xlu0 %25
  %vm27 = vcmp.eq.s32.totalorder %v26, %v18
  %v28 = vsel %vm27, 1, 0
  %v29 = vcvt.s32.f32 %v28
  %vm30 = vcmask 261120
  %v32 = vsel %vm30, %v29, 0
  %34 = vmatprep.subr.mxu0 0.0
  %35 = vmatpush1.msra.mxu0 %v20
  %36 = vmatprep.subr.mxu0 0.0
  %37 = vmatpush1.msra.mxu0 %v21
  %38 = vmatprep.subr.mxu0 0.0
  %39 = vmatpush1.msra.mxu0 %v22
  %40 = vmatprep.subr.mxu0 0.0
  %41 = vmatpush1.msra.mxu0 %v23
  %42 = vmatprep.subr.mxu0 0.0
  %43 = vmatpush1.msra.mxu0 0.0
  %44 = vmatprep.subr.mxu0 0.0
  %45 = vmatpush1.msra.mxu0 0.0
  %46 = vmatprep.subr.mxu0 0.0
  %47 = vmatpush1.msra.mxu0 0.0
  %48 = vmatprep.subr.mxu0 0.0
  %49 = vmatpush1.msra.mxu0 0.0
  %50 = vmatprep.subr.mxu0 0.0
  %51 = vmatpush1.msra.mxu0 0.0
  %52 = vmatprep.subr.mxu0 0.0
  %53 = vmatpush1.msra.mxu0 0.0
  %54 = vmatprep.subr.mxu0 0.0
  %55 = vmatpush1.msra.mxu0 0.0
  %56 = vmatprep.subr.mxu0 0.0
  %57 = vmatpush1.msra.mxu0 0.0
  %58 = vmatprep.subr.mxu0 0.0
  %59 = vmatpush1.msra.mxu0 0.0
  %60 = vmatprep.subr.mxu0 0.0
  %61 = vmatpush1.msra.mxu0 0.0
  %62 = vmatprep.subr.mxu0 0.0
  %63 = vmatpush1.msra.mxu0 0.0
  %64 = vmatprep.subr.mxu0 0.0
  %65 = vmatpush1.msra.mxu0 0.0
  %66 = vmatprep.subr.mxu0 0.0
  %67 = vmatpush1.msra.mxu0 0.0
  %68 = vmatprep.subr.mxu0 0.0
  %69 = vmatpush1.msra.mxu0 0.0
  %70 = vmatprep.subr.mxu0 0.0
  %71 = vmatpush1.msra.mxu0 0.0
  %72 = vmatprep.subr.mxu0 0.0
  %73 = vmatpush1.msra.mxu0 0.0
  %74 = vmatprep.subr.mxu0 0.0
  %75 = vmatpush1.msra.mxu0 0.0
  %76 = vmatprep.subr.mxu0 0.0
  %77 = vmatpush1.msra.mxu0 0.0
  %78 = vmatprep.subr.mxu0 0.0
  %79 = vmatpush1.msra.mxu0 0.0
  %80 = vmatprep.subr.mxu0 0.0
  %81 = vmatpush1.msra.mxu0 0.0
  %82 = vmatprep.subr.mxu0 0.0
  %83 = vmatpush1.msra.mxu0 0.0
  %84 = vmatprep.subr.mxu0 0.0
  %85 = vmatpush1.msra.mxu0 0.0
  %86 = vmatprep.subr.mxu0 0.0
  %87 = vmatpush1.msra.mxu0 0.0
  %88 = vmatprep.subr.mxu0 0.0
  %89 = vmatpush1.msra.mxu0 0.0
  %90 = vmatprep.subr.mxu0 0.0
  %91 = vmatpush1.msra.mxu0 0.0
  %92 = vmatprep.subr.mxu0 0.0
  %93 = vmatpush1.msra.mxu0 0.0
  %94 = vmatprep.subr.mxu0 0.0
  %95 = vmatpush1.msra.mxu0 0.0
  %96 = vmatprep.subr.mxu0 0.0
  %97 = vmatpush1.msra.mxu0 0.0
  %98 = vmatprep.mubr.f32.mxu0 0.0
  %99 = vmatmul.mubr.f32.gmra.mrb[0].mxu0 %v32
  %v100 = vpop.f32.mrb[0].mxu0
  %v101 = vadd.f32 0.0, %v100
  %v102 = vpop.f32.mrb[0].mxu0
  %103 = vdwg.mxu0
  %v104 = vmul.f32 %v101, %v101
  %v105 = vsel %vm30, %v104, 0.0
  %106 = vadd.xlane.f32.xlu0 %v105
  %v107 = vpop.xlane.xlu0 %106
  %vm108 = vcmp.gt.f32.partialorder %v107, 4.0
  %v109 = vrsqrt.pop %v107
  %v110 = vmul.f32 %v109, 2.0
  %v111 = vsel %vm108, %v110, 1.0
  %v112 = vmul.f32 %v111, %v101
  %v113 = vmul.f32 %v111, %v111
  %v114 = vmul.f32 %v113, %v107
  %v115 = vld [vmem:[%s1] sm:$0xff]
  %v116 = vld [vmem:[%s1 + $0x8] sm:$0xff]
  %v117 = vld [vmem:[%s1 + $0x10] sm:$0xff]
  %v118 = vld [vmem:[%s1 + $0x18] sm:$0xff]
  %v119 = vld [vmem:[%s3] sm:$0xff]
  %v120 = vld [vmem:[%s3 + $0x8] sm:$0xff]
  %121 = vset.pattern.permute.xlu0 0
  %122 = vperm.xlu0 %121, %v115
  %v123 = vpop.permute.xlu0 %122
  %124 = vset.pattern.permute.xlu0 0
  %125 = vperm.xlu0 %124, %v116
  %v126 = vpop.permute.xlu0 %125
  %127 = vset.pattern.permute.xlu0 0
  %128 = vperm.xlu0 %127, %v117
  %v129 = vpop.permute.xlu0 %128
  %130 = vset.pattern.permute.xlu0 0
  %131 = vperm.xlu0 %130, %v118
  %v132 = vpop.permute.xlu0 %131
  %vm133 = vcmp.eq.s32.totalorder %v123, %v18
  %vm134 = vcmp.eq.s32.totalorder %v126, %v18
  %vm135 = vcmp.eq.s32.totalorder %v129, %v18
  %vm136 = vcmp.eq.s32.totalorder %v132, %v18
  %v137 = vsel %vm133, 1, 0
  %v138 = vsel %vm134, 1, 0
  %v139 = vsel %vm135, 1, 0
  %v140 = vsel %vm136, 1, 0
  %v141 = vcvt.s32.f32 %v137
  %v142 = vcvt.s32.f32 %v138
  %v143 = vcvt.s32.f32 %v139
  %v144 = vcvt.s32.f32 %v140
  %vm145 = vcmask 130048
  %v147 = vsel %vm145, %v141, 0
  %v150 = vsel %vm145, %v142, 0
  %v153 = vsel %vm145, %v143, 0
  %v156 = vsel %vm145, %v144, 0
  %158 = vmatprep.subr.mxu0 0.0
  %159 = vmatpush1.msra.mxu0 %v119
  %160 = vmatprep.subr.mxu0 0.0
  %161 = vmatpush1.msra.mxu0 %v120
  %162 = vmatprep.subr.mxu0 0.0
  %163 = vmatpush1.msra.mxu0 0.0
  %164 = vmatprep.subr.mxu0 0.0
  %165 = vmatpush1.msra.mxu0 0.0
  %166 = vmatprep.subr.mxu0 0.0
  %167 = vmatpush1.msra.mxu0 0.0
  %168 = vmatprep.subr.mxu0 0.0
  %169 = vmatpush1.msra.mxu0 0.0
  %170 = vmatprep.subr.mxu0 0.0
  %171 = vmatpush1.msra.mxu0 0.0
  %172 = vmatprep.subr.mxu0 0.0
  %173 = vmatpush1.msra.mxu0 0.0
  %174 = vmatprep.subr.mxu0 0.0
  %175 = vmatpush1.msra.mxu0 0.0
  %176 = vmatprep.subr.mxu0 0.0
  %177 = vmatpush1.msra.mxu0 0.0
  %178 = vmatprep.subr.mxu0 0.0
  %179 = vmatpush1.msra.mxu0 0.0
  %180 = vmatprep.subr.mxu0 0.0
  %181 = vmatpush1.msra.mxu0 0.0
  %182 = vmatprep.subr.mxu0 0.0
  %183 = vmatpush1.msra.mxu0 0.0
  %184 = vmatprep.subr.mxu0 0.0
  %185 = vmatpush1.msra.mxu0 0.0
  %186 = vmatprep.subr.mxu0 0.0
  %187 = vmatpush1.msra.mxu0 0.0
  %188 = vmatprep.subr.mxu0 0.0
  %189 = vmatpush1.msra.mxu0 0.0
  %190 = vmatprep.subr.mxu0 0.0
  %191 = vmatpush1.msra.mxu0 0.0
  %192 = vmatprep.subr.mxu0 0.0
  %193 = vmatpush1.msra.mxu0 0.0
  %194 = vmatprep.subr.mxu0 0.0
  %195 = vmatpush1.msra.mxu0 0.0
  %196 = vmatprep.subr.mxu0 0.0
  %197 = vmatpush1.msra.mxu0 0.0
  %198 = vmatprep.subr.mxu0 0.0
  %199 = vmatpush1.msra.mxu0 0.0
  %200 = vmatprep.subr.mxu0 0.0
  %201 = vmatpush1.msra.mxu0 0.0
  %202 = vmatprep.subr.mxu0 0.0
  %203 = vmatpush1.msra.mxu0 0.0
  %204 = vmatprep.subr.mxu0 0.0
  %205 = vmatpush1.msra.mxu0 0.0
  %206 = vmatprep.subr.mxu0 0.0
  %207 = vmatpush1.msra.mxu0 0.0
  %208 = vmatprep.subr.mxu0 0.0
  %209 = vmatpush1.msra.mxu0 0.0
  %210 = vmatprep.subr.mxu0 0.0
  %211 = vmatpush1.msra.mxu0 0.0
  %212 = vmatprep.subr.mxu0 0.0
  %213 = vmatpush1.msra.mxu0 0.0
  %214 = vmatprep.subr.mxu0 0.0
  %215 = vmatpush1.msra.mxu0 0.0
  %216 = vmatprep.subr.mxu0 0.0
  %217 = vmatpush1.msra.mxu0 0.0
  %218 = vmatprep.subr.mxu0 0.0
  %219 = vmatpush1.msra.mxu0 0.0
  %220 = vmatprep.subr.mxu0 0.0
  %221 = vmatpush1.msra.mxu0 0.0
  %222 = vmatprep.mubr.f32.mxu0 0.0
  %223 = vmatmul.mubr.f32.gmra.mrb[0].mxu0 %v147
  %v224 = vpop.f32.mrb[0].mxu0
  %v225 = vadd.f32 0.0, %v224
  %v226 = vpop.f32.mrb[0].mxu0
  %227 = vmatprep.mubr.f32.mxu0 0.0
  %228 = vmatmul.mubr.f32.gmra.mrb[0].mxu0 %v150
  %v229 = vpop.f32.mrb[0].mxu0
  %v230 = vadd.f32 0.0, %v229
  %v231 = vpop.f32.mrb[0].mxu0
  %232 = vmatprep.mubr.f32.mxu0 0.0
  %233 = vmatmul.mubr.f32.gmra.mrb[0].mxu0 %v153
  %v234 = vpop.f32.mrb[0].mxu0
  %v235 = vadd.f32 0.0, %v234
  %v236 = vpop.f32.mrb[0].mxu0
  %237 = vmatprep.mubr.f32.mxu0 0.0
  %238 = vmatmul.mubr.f32.gmra.mrb[0].mxu0 %v156
  %v239 = vpop.f32.mrb[0].mxu0
  %v240 = vadd.f32 0.0, %v239
  %v241 = vpop.f32.mrb[0].mxu0
  %242 = vdwg.mxu0
  %v243 = vmul.f32 %v225, %v225
  %v244 = vmul.f32 %v230, %v230
  %v245 = vmul.f32 %v235, %v235
  %v246 = vmul.f32 %v240, %v240
  %v247 = vsel %vm30, %v243, 0.0
  %248 = vadd.xlane.f32.xlu0 %v247
  %v249 = vpop.xlane.xlu0 %248
  %v250 = vsel %vm30, %v244, 0.0
  %251 = vadd.xlane.f32.xlu0 %v250
  %v252 = vpop.xlane.xlu0 %251
  %v253 = vsel %vm30, %v245, 0.0
  %254 = vadd.xlane.f32.xlu0 %v253
  %v255 = vpop.xlane.xlu0 %254
  %v256 = vsel %vm30, %v246, 0.0
  %257 = vadd.xlane.f32.xlu0 %v256
  %v258 = vpop.xlane.xlu0 %257
  %vm259 = vcmp.gt.f32.partialorder %v249, 4.0
  %vm260 = vcmp.gt.f32.partialorder %v252, 4.0
  %vm261 = vcmp.gt.f32.partialorder %v255, 4.0
  %vm262 = vcmp.gt.f32.partialorder %v258, 4.0
  %v263 = vrsqrt.pop %v249
  %v264 = vrsqrt.pop %v252
  %v265 = vrsqrt.pop %v255
  %v266 = vrsqrt.pop %v258
  %v267 = vmul.f32 %v263, 2.0
  %v268 = vmul.f32 %v264, 2.0
  %v269 = vmul.f32 %v265, 2.0
  %v270 = vmul.f32 %v266, 2.0
  %v271 = vsel %vm259, %v267, 1.0
  %v272 = vsel %vm260, %v268, 1.0
  %v273 = vsel %vm261, %v269, 1.0
  %v274 = vsel %vm262, %v270, 1.0
  %v275 = vmul.f32 %v271, %v225
  %v276 = vmul.f32 %v272, %v230
  %v277 = vmul.f32 %v273, %v235
  %v278 = vmul.f32 %v274, %v240
  %v279 = vmul.f32 %v271, %v271
  %v280 = vmul.f32 %v272, %v272
  %v281 = vmul.f32 %v273, %v273
  %v282 = vmul.f32 %v274, %v274
  %v283 = vmul.f32 %v279, %v249
  %v284 = vmul.f32 %v280, %v252
  %v285 = vmul.f32 %v281, %v255
  %v286 = vmul.f32 %v282, %v258
  %v287 = vadd.f32 %v112, %v275
  %v288 = vadd.f32 %v114, %v283
  %v289 = vadd.f32 %v287, %v276
  %v290 = vadd.f32 %v288, %v284
  %v291 = vadd.f32 %v289, %v277
  %v292 = vadd.f32 %v290, %v285
  %v293 = vadd.f32 %v291, %v278
  %v294 = vadd.f32 %v292, %v286
  %v295 = vmul.f32 %v293, %v293
  %v296 = vsel %vm30, %v295, 0.0
  %297 = vadd.xlane.f32.xlu0 %v296
  %v298 = vpop.xlane.xlu0 %297
  %v299 = vsub.f32 %v298, %v294
  %v300 = vmul.f32 %v299, 0.5
  %v301 = vxor.u32 %v300, 2147483648
  %v302 = vmul.f32 %v301, 1.442695
  %v303 = vpow.pop %v302
  %v304 = vadd.f32 %v303, 1.0
  %v305 = vrcp.pop %v304
  %v306 = vmul.f32 1.0, %v305
  %vm307 = vcmask 7168
  %308 = vst.msk [vmem:[%s4] sm:$0xff] %vm307, %v306
  // Predicated region
  $region18: #{fm_forward.1} parent=0 // pred_check
    _
  $region19: #{fm_forward.1} parent=0 // pred_check_branch
    %310 = sbr.rel (0) target = $region21
  $region20: #{fm_forward.1} parent=0 // pred_region
    _
  $region21: #{fm_forward.1} parent=0 // pred_fallthru
    _
  // Predicated region
  $region22: #{fm_forward.1} parent=0 // pred_check
    _
  $region23: #{fm_forward.1} parent=0 // pred_check_branch
    %312 = sbr.rel (0) target = $region25
  $region24: #{fm_forward.1} parent=0 // pred_region
    _
  $region25: #{fm_forward.1} parent=0 // pred_fallthru
    _

</llo_original>
